<compile_context>
chip_gen: v7x
topology: tpu7x:2x2x1
jax: 0.10.0
libtpu: 0.0.40
codegen_flags: <defaults>
</compile_context>

<pallas_src>
import functools

import jax
import jax.numpy as jnp
from jax.experimental import pallas as pl
from jax.experimental.pallas import tpu as pltpu

LANE = 128
SUBLANE = 8


def _round_up(x, m):
    return ((x + m - 1) // m) * m


def _actor_kernel(s_ref, w1_ref, w2_ref, w3_ref, b_ref, o_ref):
    fc1 = w1_ref.shape[1]
    fc2 = w2_ref.shape[1]
    apad = w3_ref.shape[1]

    # Activations fed to the MXU in bf16, accumulate in f32, elementwise in f32.
    x = s_ref[...].astype(jnp.bfloat16)

    b1 = b_ref[0:1, :fc1]
    b2 = b_ref[1:2, :fc2]
    b3 = b_ref[2:3, :apad]

    # fc1 + ReLU
    h1 = jnp.dot(x, w1_ref[...], preferred_element_type=jnp.float32) + b1
    h1 = jnp.maximum(h1, 0.0)
    # fc2 + ReLU
    h2 = jnp.dot(h1.astype(jnp.bfloat16), w2_ref[...],
                 preferred_element_type=jnp.float32) + b2
    h2 = jnp.maximum(h2, 0.0)
    # fc3 (lane-padded to 128) + tanh -> full-width, lane-dense store
    h3 = jnp.dot(h2.astype(jnp.bfloat16), w3_ref[...],
                 preferred_element_type=jnp.float32) + b3
    o_ref[...] = jnp.tanh(h3)


def pack_actor_params(w1, b1, w2, b2, w3, b3):
    """One-time conversion of f32 params -> kernel-ready packed params.

    Returns (w1_bf16, w2_bf16, w3_padded_bf16, bias_packed_f32).
    Padded w3 columns are zero so padded outputs are tanh(0) = 0.
    """
    _, fc1 = w1.shape
    fc2 = w2.shape[1]
    action_size = w3.shape[1]
    apad = _round_up(action_size, LANE)

    w3p = jnp.zeros((fc2, apad), jnp.float32).at[:, :action_size].set(w3)

    wmax = _round_up(max(fc1, fc2, apad), LANE)
    bias = jnp.zeros((3, wmax), jnp.float32)
    bias = bias.at[0, :fc1].set(b1.reshape(-1))
    bias = bias.at[1, :fc2].set(b2.reshape(-1))
    bias = bias.at[2, :action_size].set(b3.reshape(-1))

    return (w1.astype(jnp.bfloat16),
            w2.astype(jnp.bfloat16),
            w3p.astype(jnp.bfloat16),
            bias)


@functools.partial(jax.jit, static_argnames=("action_size",))
def actor_forward(state, w1, w2, w3p, bias, *, action_size):
    B, state_size = state.shape
    fc1 = w1.shape[1]
    fc2 = w2.shape[1]
    apad = w3p.shape[1]

    # Batch tile: sublane-aligned, capped so double-buffered tiles fit v7x VMEM.
    tile_b = min(512, _round_up(B, SUBLANE))
    b_pad = _round_up(B, tile_b)
    if b_pad != B:
        state = jnp.pad(state, ((0, b_pad - B), (0, 0)))

    grid = (b_pad // tile_b,)

    flops = 2 * b_pad * (state_size * fc1 + fc1 * fc2 + fc2 * apad)
    bytes_accessed = (b_pad * state_size * 4      # state (f32)
                      + w1.size * 2 + w2.size * 2 + w3p.size * 2   # bf16 weights
                      + bias.size * 4             # packed biases (f32)
                      + b_pad * apad * 4)         # output (f32)
    cost = pl.CostEstimate(flops=flops,
                           transcendentals=b_pad * apad,
                           bytes_accessed=bytes_accessed)

    out = pl.pallas_call(
        _actor_kernel,
        out_shape=jax.ShapeDtypeStruct((b_pad, apad), jnp.float32),
        grid=grid,
        in_specs=[
            pl.BlockSpec((tile_b, state_size), lambda i: (i, 0)),   # state: tiled over batch
            pl.BlockSpec((state_size, fc1), lambda i: (0, 0)),      # w1: resident
            pl.BlockSpec((fc1, fc2), lambda i: (0, 0)),             # w2: resident
            pl.BlockSpec((fc2, apad), lambda i: (0, 0)),            # w3 (lane-padded): resident
            pl.BlockSpec(bias.shape, lambda i: (0, 0)),             # packed biases: resident
        ],
        out_specs=pl.BlockSpec((tile_b, apad), lambda i: (i, 0)),
        compiler_params=pltpu.CompilerParams(
            dimension_semantics=("parallel",)),
        cost_estimate=cost,
    )(state, w1, w2, w3p, bias)

    # Slice back to the logical (B, action_size) output.
    return out[:B, :action_size]


def init_actor_params(key, state_size, action_size, fc1_units=128, fc2_units=128):
    """Deterministic init mirroring Actor.reset_parameters().

    PyTorch's hidden_init uses weight.size()[0] == out_features, so the uniform
    limit is 1/sqrt(fc1_units) and 1/sqrt(fc2_units). Weights stored transposed
    (in_features, out_features) for x @ W.
    """
    k1, k2, k3 = jax.random.split(key, 3)
    lim1 = 1.0 / jnp.sqrt(jnp.float32(fc1_units))
    lim2 = 1.0 / jnp.sqrt(jnp.float32(fc2_units))
    lim3 = jnp.float32(3e-3)

    w1 = jax.random.uniform(k1, (state_size, fc1_units), jnp.float32, -lim1, lim1)
    w2 = jax.random.uniform(k2, (fc1_units, fc2_units), jnp.float32, -lim2, lim2)
    w3 = jax.random.uniform(k3, (fc2_units, action_size), jnp.float32, -lim3, lim3)
    b1 = jnp.full((1, fc1_units), 0.1, jnp.float32)
    b2 = jnp.full((1, fc2_units), 0.1, jnp.float32)
    b3 = jnp.full((1, action_size), 0.1, jnp.float32)
    return w1, b1, w2, b2, w3, b3


def actor_reference(state, w1, b1, w2, b2, w3, b3):
    h1 = jnp.maximum(state @ w1 + b1, 0.0)
    h2 = jnp.maximum(h1 @ w2 + b2, 0.0)
    return jnp.tanh(h2 @ w3 + b3)


if __name__ == "__main__":
    key = jax.random.PRNGKey(0)
    kp, ks = jax.random.split(key)

    B = 8            # batch
    STATE = 32       # state_size
    ACTION = 8       # action_size
    FC1 = 128
    FC2 = 128

    params_f32 = init_actor_params(kp, STATE, ACTION, FC1, FC2)
    state = jax.random.normal(ks, (B, STATE), jnp.float32)

    packed = pack_actor_params(*params_f32)
    out = actor_forward(state, *packed, action_size=ACTION)
    out = jax.block_until_ready(out)

    ref = actor_reference(state, *params_f32)
    assert out.shape == (B, ACTION), out.shape
    # bf16 weights/activations in the matmuls -> relaxed tolerance vs f32 reference.
    assert jnp.allclose(out, ref, atol=3e-2, rtol=3e-2), "mismatch vs reference"

    print("KERNEL_OK")
</pallas_src>

<mosaic_0001>
module attributes {stable_mosaic.version = 11 : i64} {
  func.func @_actor_kernel(%arg0: i32, %arg1: memref<8x32xf32, #tpu.memory_space<vmem>>, %arg2: memref<32x128xbf16, #tpu.memory_space<vmem>>, %arg3: memref<128x128xbf16, #tpu.memory_space<vmem>>, %arg4: memref<128x128xbf16, #tpu.memory_space<vmem>>, %arg5: memref<3x128xf32, #tpu.memory_space<vmem>>, %arg6: memref<8x128xf32, #tpu.memory_space<vmem>>) attributes {dimension_semantics = [#tpu.dimension_semantics<parallel>], iteration_bounds = array<i64: 1>, scalar_prefetch = 0 : i64, scratch_operands = 0 : i64, tpu.core_type = #tpu.core_type<tc>, window_params = [{transform_indices = @transform_0, window_bounds = array<i64: 8, 32>}, {pipeline_mode = #tpu.pipeline_mode<synchronous>, transform_indices = @transform_1, window_bounds = array<i64: 32, 128>}, {pipeline_mode = #tpu.pipeline_mode<synchronous>, transform_indices = @transform_2, window_bounds = array<i64: 128, 128>}, {pipeline_mode = #tpu.pipeline_mode<synchronous>, transform_indices = @transform_3, window_bounds = array<i64: 128, 128>}, {pipeline_mode = #tpu.pipeline_mode<synchronous>, transform_indices = @transform_4, window_bounds = array<i64: 3, 128>}, {transform_indices = @transform_5, window_bounds = array<i64: 8, 128>}]} {
    %c0 = arith.constant 0 : index
    %c0_0 = arith.constant 0 : index
    %0 = vector.load %arg1[%c0, %c0_0] : memref<8x32xf32, #tpu.memory_space<vmem>>, vector<8x32xf32>
    %1 = arith.truncf %0 : vector<8x32xf32> to vector<8x32xbf16>
    %c0_1 = arith.constant 0 : index
    %c0_2 = arith.constant 0 : index
    %2 = vector.load %arg5[%c0_1, %c0_2] : memref<3x128xf32, #tpu.memory_space<vmem>>, vector<1x128xf32>
    %c1 = arith.constant 1 : index
    %c0_3 = arith.constant 0 : index
    %3 = vector.load %arg5[%c1, %c0_3] : memref<3x128xf32, #tpu.memory_space<vmem>>, vector<1x128xf32>
    %c2 = arith.constant 2 : index
    %c0_4 = arith.constant 0 : index
    %4 = vector.load %arg5[%c2, %c0_4] : memref<3x128xf32, #tpu.memory_space<vmem>>, vector<1x128xf32>
    %c0_5 = arith.constant 0 : index
    %c0_6 = arith.constant 0 : index
    %5 = vector.load %arg2[%c0_5, %c0_6] : memref<32x128xbf16, #tpu.memory_space<vmem>>, vector<32x128xbf16>
    %cst = arith.constant dense<0.000000e+00> : vector<8x128xf32>
    %6 = tpu.matmul %1, %5, %cst {dimension_numbers = #tpu.dot_dimension_numbers<[1], [0], [0], [1], [0, 0, 1, 1], [], []>} : vector<8x32xbf16>, vector<32x128xbf16>, vector<8x128xf32> -> vector<8x128xf32>
    %7 = vector.broadcast %2 : vector<1x128xf32> to vector<8x128xf32>
    %8 = arith.addf %6, %7 : vector<8x128xf32>
    %cst_7 = arith.constant 0.000000e+00 : f32
    %9 = vector.broadcast %cst_7 : f32 to vector<8x128xf32>
    %10 = arith.maximumf %8, %9 : vector<8x128xf32>
    %11 = arith.truncf %10 : vector<8x128xf32> to vector<8x128xbf16>
    %c0_8 = arith.constant 0 : index
    %c0_9 = arith.constant 0 : index
    %12 = vector.load %arg3[%c0_8, %c0_9] : memref<128x128xbf16, #tpu.memory_space<vmem>>, vector<128x128xbf16>
    %cst_10 = arith.constant dense<0.000000e+00> : vector<8x128xf32>
    %13 = tpu.matmul %11, %12, %cst_10 {dimension_numbers = #tpu.dot_dimension_numbers<[1], [0], [0], [1], [0, 0, 1, 1], [], []>} : vector<8x128xbf16>, vector<128x128xbf16>, vector<8x128xf32> -> vector<8x128xf32>
    %14 = vector.broadcast %3 : vector<1x128xf32> to vector<8x128xf32>
    %15 = arith.addf %13, %14 : vector<8x128xf32>
    %cst_11 = arith.constant 0.000000e+00 : f32
    %16 = vector.broadcast %cst_11 : f32 to vector<8x128xf32>
    %17 = arith.maximumf %15, %16 : vector<8x128xf32>
    %18 = arith.truncf %17 : vector<8x128xf32> to vector<8x128xbf16>
    %c0_12 = arith.constant 0 : index
    %c0_13 = arith.constant 0 : index
    %19 = vector.load %arg4[%c0_12, %c0_13] : memref<128x128xbf16, #tpu.memory_space<vmem>>, vector<128x128xbf16>
    %cst_14 = arith.constant dense<0.000000e+00> : vector<8x128xf32>
    %20 = tpu.matmul %18, %19, %cst_14 {dimension_numbers = #tpu.dot_dimension_numbers<[1], [0], [0], [1], [0, 0, 1, 1], [], []>} : vector<8x128xbf16>, vector<128x128xbf16>, vector<8x128xf32> -> vector<8x128xf32>
    %21 = vector.broadcast %4 : vector<1x128xf32> to vector<8x128xf32>
    %22 = arith.addf %20, %21 : vector<8x128xf32>
    %23 = math.tanh %22 : vector<8x128xf32>
    %c0_15 = arith.constant 0 : index
    %c0_16 = arith.constant 0 : index
    %24 = vector.load %arg6[%c0_15, %c0_16] : memref<8x128xf32, #tpu.memory_space<vmem>>, vector<8x128xf32>
    tpu.vector_store %arg6[%c0_15, %c0_16], %23 {strides = array<i32>} : memref<8x128xf32, #tpu.memory_space<vmem>>, vector<8x128xf32>,
    return
  }
  func.func @transform_0(%arg0: i32) -> (i32, i32) {
    %c0_i32 = arith.constant 0 : i32
    %c0_i32_0 = arith.constant 0 : i32
    return %arg0, %c0_i32 : i32, i32
  }
  func.func @transform_1(%arg0: i32) -> (i32, i32) {
    %c0_i32 = arith.constant 0 : i32
    %c0_i32_0 = arith.constant 0 : i32
    %c0_i32_1 = arith.constant 0 : i32
    return %c0_i32, %c0_i32_0 : i32, i32
  }
  func.func @transform_2(%arg0: i32) -> (i32, i32) {
    %c0_i32 = arith.constant 0 : i32
    %c0_i32_0 = arith.constant 0 : i32
    %c0_i32_1 = arith.constant 0 : i32
    return %c0_i32, %c0_i32_0 : i32, i32
  }
  func.func @transform_3(%arg0: i32) -> (i32, i32) {
    %c0_i32 = arith.constant 0 : i32
    %c0_i32_0 = arith.constant 0 : i32
    %c0_i32_1 = arith.constant 0 : i32
    return %c0_i32, %c0_i32_0 : i32, i32
  }
  func.func @transform_4(%arg0: i32) -> (i32, i32) {
    %c0_i32 = arith.constant 0 : i32
    %c0_i32_0 = arith.constant 0 : i32
    %c0_i32_1 = arith.constant 0 : i32
    return %c0_i32, %c0_i32_0 : i32, i32
  }
  func.func @transform_5(%arg0: i32) -> (i32, i32) {
    %c0_i32 = arith.constant 0 : i32
    %c0_i32_0 = arith.constant 0 : i32
    return %arg0, %c0_i32 : i32, i32
  }
}

</mosaic_0001>

<llo_original>
// kernel: actor_forward.1
$region0: #{actor_forward.1}
  #allocation0 [shape = 'u32[]', space=smem, size = 0x4, offset = 0x4, fixed_abs, tag = 'smem constant byte address 0x4 - core index']
  #allocation1 [shape = 'u32[144,128]{1,0:T(1,128)}', space=vmem, size = 0x12000, scoped, tag = 'internal scratch']
  %s0 = inlined_call_operand.hbm [shape: f32[8,32], index: 0, kind: input, shape index: {}]
  %s1 = inlined_call_operand.hbm [shape: bf16[32,128], index: 1, kind: input, shape index: {}]
  %s2 = inlined_call_operand.hbm [shape: bf16[128,128], index: 2, kind: input, shape index: {}]
  %s3 = inlined_call_operand.hbm [shape: bf16[128,128], index: 3, kind: input, shape index: {}]
  %s4 = inlined_call_operand.vmem [shape: f32[3,128], index: 4, kind: input, shape index: {}]
  %s5 = inlined_call_operand.hbm [shape: f32[8,128], index: 5, kind: output, shape index: {}]
  %s6 = sld [smem:[#allocation0]]
  $region46: #{actor_forward.1} parent=0
    _
  %s8 = ssub.s32 1, %s6
  %s9 = scalar_select 0, %s8, %s6
  $region1: #{actor_forward.1} parent=0
    #allocation2 [shape = 'u8[4096]{0}', space=vmem, size = 0x1000, scoped, tag = 'input window, operand 0, single buffered']
    #allocation3 [shape = 's32[1]{0}', space=sflag, size = 0x4, scoped, tag = 'scoped memory for actor_forward.1']
    #allocation4 [shape = 's32[1]{0}', space=sflag, size = 0x4, scoped, tag = 'scoped memory for actor_forward.1']
    #allocation5 [shape = 'u8[8192]{0}', space=vmem, size = 0x2000, scoped, tag = 'input window, operand 1, single buffered']
    #allocation6 [shape = 's32[1]{0}', space=sflag, size = 0x4, scoped, tag = 'scoped memory for actor_forward.1']
    #allocation7 [shape = 'u8[32768]{0}', space=vmem, size = 0x8000, scoped, tag = 'input window, operand 2, single buffered']
    #allocation8 [shape = 'u8[32768]{0}', space=vmem, size = 0x8000, scoped, tag = 'input window, operand 3, single buffered']
    #allocation9 [shape = 's32[1]{0}', space=sflag, size = 0x4, scoped, tag = 'scoped memory for actor_forward.1']
    #allocation10 [shape = 'u8[4096]{0}', space=vmem, size = 0x1000, scoped, tag = 'output window, operand 0, single buffered']
    %10 = vsyncpa [#allocation3], 0
    %11 = vsyncpa [#allocation6], 0
    %12 = vsyncpa [#allocation9], 0
    %13 = vsyncpa [#allocation4], 0
    // Predicated region
    $region2: #{actor_forward.1} parent=1 // pred_check
      _
    $region3: #{actor_forward.1} parent=1 // pred_check_branch
      %15 = sbr.rel (0) target = $region5
    $region4: #{actor_forward.1} parent=1 // pred_region
      %s17 = ssub.s32 128, 128
      %18 = vsyncadd [#allocation3], %s17
      %s20 = sshll.u32 [#allocation2], 4
      %s21 = int_to_ptr.vmem [resolvable:$true] %s20
      %23 = dma.hbm_to_vmem [thread:$0]  %s0, 128, %s21, [#allocation3]
    $region5: #{actor_forward.1} parent=1 // pred_fallthru
      _
    // Predicated region
    $region6: #{actor_forward.1} parent=1 // pred_check
      _
    $region7: #{actor_forward.1} parent=1 // pred_check_branch
      %25 = sbr.rel (0) target = $region9
    $region8: #{actor_forward.1} parent=1 // pred_region
      %s27 = ssub.s32 256, 256
      %28 = vsyncadd [#allocation6], %s27
      %s29 = sshll.u32 [#allocation5], 4
      %s30 = int_to_ptr.vmem [resolvable:$true] %s29
      %35 = dma.hbm_to_vmem [thread:$0]  %s1, 256, %s30, [#allocation6], 64, 64, 4
    $region9: #{actor_forward.1} parent=1 // pred_fallthru
      _
    // Predicated region
    $region10: #{actor_forward.1} parent=1 // pred_check
      _
    $region11: #{actor_forward.1} parent=1 // pred_check_branch
      %37 = sbr.rel (0) target = $region13
    $region12: #{actor_forward.1} parent=1 // pred_region
      %s39 = ssub.s32 1024, 1024
      %40 = vsyncadd [#allocation6], %s39
      %s41 = sshll.u32 [#allocation7], 4
      %s42 = int_to_ptr.vmem [resolvable:$true] %s41
      %47 = dma.hbm_to_vmem [thread:$0]  %s2, 1024, %s42, [#allocation6], 64, 64, 4
    $region13: #{actor_forward.1} parent=1 // pred_fallthru
      _
    // Predicated region
    $region14: #{actor_forward.1} parent=1 // pred_check
      _
    $region15: #{actor_forward.1} parent=1 // pred_check_branch
      %49 = sbr.rel (0) target = $region17
    $region16: #{actor_forward.1} parent=1 // pred_region
      %s51 = ssub.s32 1024, 1024
      %52 = vsyncadd [#allocation9], %s51
      %s53 = sshll.u32 [#allocation8], 4
      %s54 = int_to_ptr.vmem [resolvable:$true] %s53
      %59 = dma.hbm_to_vmem [thread:$0]  %s3, 1024, %s54, [#allocation9], 64, 64, 4
    $region17: #{actor_forward.1} parent=1 // pred_fallthru
      _
    // Predicated region
    $region18: #{actor_forward.1} parent=1 // pred_check
      _
    $region19: #{actor_forward.1} parent=1 // pred_check_branch
      %61 = sbr.rel (0) target = $region21
    $region20: #{actor_forward.1} parent=1 // pred_region
      _
    $region21: #{actor_forward.1} parent=1 // pred_fallthru
      _
    // Predicated region
    $region22: #{actor_forward.1} parent=1 // pred_check
      _
    $region23: #{actor_forward.1} parent=1 // pred_check_branch
      %63 = sbr.rel (0) target = $region25
    $region24: #{actor_forward.1} parent=1 // pred_region
      %64 = dma.done [#allocation3], 128
    $region25: #{actor_forward.1} parent=1 // pred_fallthru
      _
    // Predicated region
    $region26: #{actor_forward.1} parent=1 // pred_check
      _
    $region27: #{actor_forward.1} parent=1 // pred_check_branch
      %66 = sbr.rel (0) target = $region29
    $region28: #{actor_forward.1} parent=1 // pred_region
      %67 = dma.done [#allocation6], 256
    $region29: #{actor_forward.1} parent=1 // pred_fallthru
      _
    // Predicated region
    $region30: #{actor_forward.1} parent=1 // pred_check
      _
    $region31: #{actor_forward.1} parent=1 // pred_check_branch
      %69 = sbr.rel (0) target = $region33
    $region32: #{actor_forward.1} parent=1 // pred_region
      %70 = dma.done [#allocation6], 1024
    $region33: #{actor_forward.1} parent=1 // pred_fallthru
      _
    // Predicated region
    $region34: #{actor_forward.1} parent=1 // pred_check
      _
    $region35: #{actor_forward.1} parent=1 // pred_check_branch
      %72 = sbr.rel (0) target = $region37
    $region36: #{actor_forward.1} parent=1 // pred_region
      %73 = dma.done [#allocation9], 1024
    $region37: #{actor_forward.1} parent=1 // pred_fallthru
      _
    %v75 = vld [vmem:[#allocation2] sm:$0xff]
    %v76 = vpack.c.bf16 %v75, %v75
    %v77 = vld [vmem:[%s4] sm:$0x1]
    %v78 = vld [vmem:[%s4 + $0x1] sm:$0x1]
    %v79 = vld [vmem:[%s4 + $0x2] sm:$0x1]
    %v80 = vld [vmem:[#allocation5] sm:$0xf]
    %v81 = vld [vmem:[#allocation5 + $0x4] sm:$0xf]
    %v82 = vld [vmem:[#allocation5 + $0x8] sm:$0xf]
    %v83 = vld [vmem:[#allocation5 + $0xc] sm:$0xf]
    %v84 = vlaneseq
    %v85 = vshrl.u32 %v84, 7
    %v86 = vsub.s32 0, %v85
    %v87 = vrot.slane %v77, %v86
    %v92 = vunpack.c.l.b16 %v80
    %v93 = vunpack.c.l.b16 %v81
    %v94 = vunpack.c.l.b16 %v82
    %v95 = vunpack.c.l.b16 %v83
    %v96 = vpack.c.b16 %v93, %v92
    %v97 = vpack.c.b16 %v95, %v94
    %vm100 = vcmask 261120
    %v102 = vsel %vm100, %v76, 0
    %104 = vmatprep.subr.bf16.mxu0 0
    %105 = vmatpush1.bf16.msra.mxu0 %v96
    %106 = vmatprep.subr.bf16.mxu0 0
    %107 = vmatpush1.bf16.msra.mxu0 %v97
    %108 = vmatprep.subr.bf16.mxu0 0
    %109 = vmatpush1.bf16.msra.mxu0 0
    %110 = vmatprep.subr.bf16.mxu0 0
    %111 = vmatpush1.bf16.msra.mxu0 0
    %112 = vmatprep.subr.bf16.mxu0 0
    %113 = vmatpush1.bf16.msra.mxu0 0
    %114 = vmatprep.subr.bf16.mxu0 0
    %115 = vmatpush1.bf16.msra.mxu0 0
    %116 = vmatprep.subr.bf16.mxu0 0
    %117 = vmatpush1.bf16.msra.mxu0 0
    %118 = vmatprep.subr.bf16.mxu0 0
    %119 = vmatpush1.bf16.msra.mxu0 0
    %120 = vmatprep.subr.bf16.mxu0 0
    %121 = vmatpush1.bf16.msra.mxu0 0
    %122 = vmatprep.subr.bf16.mxu0 0
    %123 = vmatpush1.bf16.msra.mxu0 0
    %124 = vmatprep.subr.bf16.mxu0 0
    %125 = vmatpush1.bf16.msra.mxu0 0
    %126 = vmatprep.subr.bf16.mxu0 0
    %127 = vmatpush1.bf16.msra.mxu0 0
    %128 = vmatprep.subr.bf16.mxu0 0
    %129 = vmatpush1.bf16.msra.mxu0 0
    %130 = vmatprep.subr.bf16.mxu0 0
    %131 = vmatpush1.bf16.msra.mxu0 0
    %132 = vmatprep.subr.bf16.mxu0 0
    %133 = vmatpush1.bf16.msra.mxu0 0
    %134 = vmatprep.subr.bf16.mxu0 0
    %135 = vmatpush1.bf16.msra.mxu0 0
    %136 = vmatprep.mubr.bf16.mxu0 0
    %137 = vmatmul.mubr.bf16.gmra.mrb[0].mxu0 %v102
    %v138 = vpop.f32.mrb[0].mxu0
    %v139 = vadd.f32 %v87, %v138
    %v140 = vpop.f32.mrb[0].mxu0
    %v141 = vpop.f32.mrb[0].mxu0
    %v142 = vpop.f32.mrb[0].mxu0
    %143 = vdwg.mxu0
    %v144 = vmax.f32 %v139, 0.0
    %v145 = vpack.c.bf16 %v144, %v144
    %v146 = vld [vmem:[#allocation7] sm:$0xf]
    %v147 = vld [vmem:[#allocation7 + $0x4] sm:$0xf]
    %v148 = vld [vmem:[#allocation7 + $0x8] sm:$0xf]
    %v149 = vld [vmem:[#allocation7 + $0xc] sm:$0xf]
    %v150 = vld [vmem:[#allocation7 + $0x10] sm:$0xf]
    %v151 = vld [vmem:[#allocation7 + $0x14] sm:$0xf]
    %v152 = vld [vmem:[#allocation7 + $0x18] sm:$0xf]
    %v153 = vld [vmem:[#allocation7 + $0x1c] sm:$0xf]
    %v154 = vld [vmem:[#allocation7 + $0x20] sm:$0xf]
    %v155 = vld [vmem:[#allocation7 + $0x24] sm:$0xf]
    %v156 = vld [vmem:[#allocation7 + $0x28] sm:$0xf]
    %v157 = vld [vmem:[#allocation7 + $0x2c] sm:$0xf]
    %v158 = vld [vmem:[#allocation7 + $0x30] sm:$0xf]
    %v159 = vld [vmem:[#allocation7 + $0x34] sm:$0xf]
    %v160 = vld [vmem:[#allocation7 + $0x38] sm:$0xf]
    %v161 = vld [vmem:[#allocation7 + $0x3c] sm:$0xf]
    %v162 = vlaneseq
    %v163 = vshrl.u32 %v162, 7
    %v164 = vsub.s32 0, %v163
    %v165 = vrot.slane %v78, %v164
    %v182 = vunpack.c.l.b16 %v146
    %v183 = vunpack.c.l.b16 %v147
    %v184 = vunpack.c.l.b16 %v148
    %v185 = vunpack.c.l.b16 %v149
    %v186 = vunpack.c.l.b16 %v150
    %v187 = vunpack.c.l.b16 %v151
    %v188 = vunpack.c.l.b16 %v152
    %v189 = vunpack.c.l.b16 %v153
    %v190 = vunpack.c.l.b16 %v154
    %v191 = vunpack.c.l.b16 %v155
    %v192 = vunpack.c.l.b16 %v156
    %v193 = vunpack.c.l.b16 %v157
    %v194 = vunpack.c.l.b16 %v158
    %v195 = vunpack.c.l.b16 %v159
    %v196 = vunpack.c.l.b16 %v160
    %v197 = vunpack.c.l.b16 %v161
    %v198 = vpack.c.b16 %v183, %v182
    %v199 = vpack.c.b16 %v185, %v184
    %v200 = vpack.c.b16 %v187, %v186
    %v201 = vpack.c.b16 %v189, %v188
    %v202 = vpack.c.b16 %v191, %v190
    %v203 = vpack.c.b16 %v193, %v192
    %v204 = vpack.c.b16 %v195, %v194
    %v205 = vpack.c.b16 %v197, %v196
    %214 = vmatprep.subr.bf16.mxu0 0
    %215 = vmatpush1.bf16.msra.mxu0 %v198
    %216 = vmatprep.subr.bf16.mxu0 0
    %217 = vmatpush1.bf16.msra.mxu0 %v199
    %218 = vmatprep.subr.bf16.mxu0 0
    %219 = vmatpush1.bf16.msra.mxu0 %v200
    %220 = vmatprep.subr.bf16.mxu0 0
    %221 = vmatpush1.bf16.msra.mxu0 %v201
    %222 = vmatprep.subr.bf16.mxu0 0
    %223 = vmatpush1.bf16.msra.mxu0 %v202
    %224 = vmatprep.subr.bf16.mxu0 0
    %225 = vmatpush1.bf16.msra.mxu0 %v203
    %226 = vmatprep.subr.bf16.mxu0 0
    %227 = vmatpush1.bf16.msra.mxu0 %v204
    %228 = vmatprep.subr.bf16.mxu0 0
    %229 = vmatpush1.bf16.msra.mxu0 %v205
    %230 = vmatprep.subr.bf16.mxu0 0
    %231 = vmatpush1.bf16.msra.mxu0 0
    %232 = vmatprep.subr.bf16.mxu0 0
    %233 = vmatpush1.bf16.msra.mxu0 0
    %234 = vmatprep.subr.bf16.mxu0 0
    %235 = vmatpush1.bf16.msra.mxu0 0
    %236 = vmatprep.subr.bf16.mxu0 0
    %237 = vmatpush1.bf16.msra.mxu0 0
    %238 = vmatprep.subr.bf16.mxu0 0
    %239 = vmatpush1.bf16.msra.mxu0 0
    %240 = vmatprep.subr.bf16.mxu0 0
    %241 = vmatpush1.bf16.msra.mxu0 0
    %242 = vmatprep.subr.bf16.mxu0 0
    %243 = vmatpush1.bf16.msra.mxu0 0
    %244 = vmatprep.subr.bf16.mxu0 0
    %245 = vmatpush1.bf16.msra.mxu0 0
    %246 = vmatprep.mubr.bf16.mxu0 0
    %247 = vmatmul.mubr.bf16.gmra.mrb[0].mxu0 %v145
    %v248 = vpop.f32.mrb[0].mxu0
    %v249 = vadd.f32 %v165, %v248
    %v250 = vpop.f32.mrb[0].mxu0
    %v251 = vpop.f32.mrb[0].mxu0
    %v252 = vpop.f32.mrb[0].mxu0
    %253 = vdwg.mxu0
    %v254 = vmax.f32 %v249, 0.0
    %v255 = vpack.c.bf16 %v254, %v254
    %v256 = vld [vmem:[#allocation8] sm:$0xf]
    %v257 = vld [vmem:[#allocation8 + $0x4] sm:$0xf]
    %v258 = vld [vmem:[#allocation8 + $0x8] sm:$0xf]
    %v259 = vld [vmem:[#allocation8 + $0xc] sm:$0xf]
    %v260 = vld [vmem:[#allocation8 + $0x10] sm:$0xf]
    %v261 = vld [vmem:[#allocation8 + $0x14] sm:$0xf]
    %v262 = vld [vmem:[#allocation8 + $0x18] sm:$0xf]
    %v263 = vld [vmem:[#allocation8 + $0x1c] sm:$0xf]
    %v264 = vld [vmem:[#allocation8 + $0x20] sm:$0xf]
    %v265 = vld [vmem:[#allocation8 + $0x24] sm:$0xf]
    %v266 = vld [vmem:[#allocation8 + $0x28] sm:$0xf]
    %v267 = vld [vmem:[#allocation8 + $0x2c] sm:$0xf]
    %v268 = vld [vmem:[#allocation8 + $0x30] sm:$0xf]
    %v269 = vld [vmem:[#allocation8 + $0x34] sm:$0xf]
    %v270 = vld [vmem:[#allocation8 + $0x38] sm:$0xf]
    %v271 = vld [vmem:[#allocation8 + $0x3c] sm:$0xf]
    %v272 = vlaneseq
    %v273 = vshrl.u32 %v272, 7
    %v274 = vsub.s32 0, %v273
    %v275 = vrot.slane %v79, %v274
    %v292 = vunpack.c.l.b16 %v256
    %v293 = vunpack.c.l.b16 %v257
    %v294 = vunpack.c.l.b16 %v258
    %v295 = vunpack.c.l.b16 %v259
    %v296 = vunpack.c.l.b16 %v260
    %v297 = vunpack.c.l.b16 %v261
    %v298 = vunpack.c.l.b16 %v262
    %v299 = vunpack.c.l.b16 %v263
    %v300 = vunpack.c.l.b16 %v264
    %v301 = vunpack.c.l.b16 %v265
    %v302 = vunpack.c.l.b16 %v266
    %v303 = vunpack.c.l.b16 %v267
    %v304 = vunpack.c.l.b16 %v268
    %v305 = vunpack.c.l.b16 %v269
    %v306 = vunpack.c.l.b16 %v270
    %v307 = vunpack.c.l.b16 %v271
    %v308 = vpack.c.b16 %v293, %v292
    %v309 = vpack.c.b16 %v295, %v294
    %v310 = vpack.c.b16 %v297, %v296
    %v311 = vpack.c.b16 %v299, %v298
    %v312 = vpack.c.b16 %v301, %v300
    %v313 = vpack.c.b16 %v303, %v302
    %v314 = vpack.c.b16 %v305, %v304
    %v315 = vpack.c.b16 %v307, %v306
    %324 = vmatprep.subr.bf16.mxu0 0
    %325 = vmatpush1.bf16.msra.mxu0 %v308
    %326 = vmatprep.subr.bf16.mxu0 0
    %327 = vmatpush1.bf16.msra.mxu0 %v309
    %328 = vmatprep.subr.bf16.mxu0 0
    %329 = vmatpush1.bf16.msra.mxu0 %v310
    %330 = vmatprep.subr.bf16.mxu0 0
    %331 = vmatpush1.bf16.msra.mxu0 %v311
    %332 = vmatprep.subr.bf16.mxu0 0
    %333 = vmatpush1.bf16.msra.mxu0 %v312
    %334 = vmatprep.subr.bf16.mxu0 0
    %335 = vmatpush1.bf16.msra.mxu0 %v313
    %336 = vmatprep.subr.bf16.mxu0 0
    %337 = vmatpush1.bf16.msra.mxu0 %v314
    %338 = vmatprep.subr.bf16.mxu0 0
    %339 = vmatpush1.bf16.msra.mxu0 %v315
    %340 = vmatprep.subr.bf16.mxu0 0
    %341 = vmatpush1.bf16.msra.mxu0 0
    %342 = vmatprep.subr.bf16.mxu0 0
    %343 = vmatpush1.bf16.msra.mxu0 0
    %344 = vmatprep.subr.bf16.mxu0 0
    %345 = vmatpush1.bf16.msra.mxu0 0
    %346 = vmatprep.subr.bf16.mxu0 0
    %347 = vmatpush1.bf16.msra.mxu0 0
    %348 = vmatprep.subr.bf16.mxu0 0
    %349 = vmatpush1.bf16.msra.mxu0 0
    %350 = vmatprep.subr.bf16.mxu0 0
    %351 = vmatpush1.bf16.msra.mxu0 0
    %352 = vmatprep.subr.bf16.mxu0 0
    %353 = vmatpush1.bf16.msra.mxu0 0
    %354 = vmatprep.subr.bf16.mxu0 0
    %355 = vmatpush1.bf16.msra.mxu0 0
    %356 = vmatprep.mubr.bf16.mxu0 0
    %357 = vmatmul.mubr.bf16.gmra.mrb[0].mxu0 %v255
    %v358 = vpop.f32.mrb[0].mxu0
    %v359 = vadd.f32 %v275, %v358
    %v360 = vpop.f32.mrb[0].mxu0
    %v361 = vpop.f32.mrb[0].mxu0
    %v362 = vpop.f32.mrb[0].mxu0
    %363 = vdwg.mxu0
    %v364 = vtanh.pop %v359
    %365 = vst [vmem:[#allocation10] sm:$0xff] %v364
    // Predicated region
    $region38: #{actor_forward.1} parent=1 // pred_check
      _
    $region39: #{actor_forward.1} parent=1 // pred_check_branch
      %367 = sbr.rel (0) target = $region41
    $region40: #{actor_forward.1} parent=1 // pred_region
      %s369 = ssub.s32 128, 128
      %370 = vsyncadd [#allocation4], %s369
      %s372 = sshll.u32 [#allocation10], 4
      %s373 = int_to_ptr.vmem [resolvable:$true] %s372
      %375 = dma.vmem_to_hbm [thread:$0]  %s373, 128, %s5, [#allocation4]
    $region41: #{actor_forward.1} parent=1 // pred_fallthru
      _
    // Predicated region
    $region42: #{actor_forward.1} parent=1 // pred_check
      _
    $region43: #{actor_forward.1} parent=1 // pred_check_branch
      %377 = sbr.rel (0) target = $region45
    $region44: #{actor_forward.1} parent=1 // pred_region
      %378 = dma.done [#allocation4], 128
    $region45: #{actor_forward.1} parent=1 // pred_fallthru
      _
    %379 = vsyncpa [#allocation3], 1
    %380 = vsyncpa [#allocation6], 1
    %381 = vsyncpa [#allocation9], 1
    %382 = vsyncpa [#allocation4], 1

</llo_original>
